<compile_context>
chip_gen: v6e
topology: v6e:2x2x1
jax: 0.10.0
libtpu: 0.0.40
codegen_flags: <defaults>
</compile_context>

<pallas_src>
import math

import numpy as np
import jax
import jax.numpy as jnp
from jax import lax
from jax.experimental import pallas as pl
from jax.experimental.pallas import tpu as pltpu

_UNROLL_MAX_WP = 16               # statically unroll the patch-column loop up to here
_VMEM_CAP_BYTES = 48 * 1024 * 1024


def _patch_geometry(h, w, ps):
    hp = int(math.ceil(h / ps))
    wp = int(math.ceil(w / ps))
    return hp, wp, hp * ps - h, wp * ps - w


def _vmem_limit_bytes():
    # Generation-aware scoped-VMEM cap: never ask for more than ~3/4 of the
    # physical VMEM (v7x only has 64 MiB per TensorCore) and never more than
    # 48 MiB.  Per-step blocks here are tiny, so this is just headroom.
    try:
        cap = int(pltpu.get_tpu_info().vmem_capacity_bytes)
    except Exception:
        cap = 64 * 1024 * 1024
    return int(min(_VMEM_CAP_BYTES, (cap * 3) // 4))


# ---------------------------------------------------------------------------
# Kernel: one (batch, patch-row) per grid step.
# ---------------------------------------------------------------------------
def _make_patch_row_kernel(c, w, ps, hp, wp, h_padding, w_padding):
    has_right = w_padding > 0
    has_bottom = h_padding > 0
    needs_slab = has_right or has_bottom
    unroll = wp <= _UNROLL_MAX_WP

    def emit_patches(read_patch, o_ref):
        # o_ref block: (1, c, wp, ps, ps); local patch j of this row -> slot j.
        if unroll:
            for j in range(wp):
                o_ref[0, :, j, :, :] = read_patch(j * ps)
        else:
            def body(j, carry):
                col0 = pl.multiple_of(j * ps, ps)
                o_ref[0, :, j, :, :] = read_patch(col0)
                return carry
            lax.fori_loop(0, wp, body, 0)

    if not needs_slab:
        def kernel(x_ref, o_ref):
            # x_ref: (1, c, ps, w) with w == wp * ps (no padding needed).
            emit_patches(lambda col0: x_ref[0, :, :, pl.ds(col0, ps)], o_ref)
        return kernel

    def kernel(*refs):
        pos = 0
        x_ref = refs[pos]; pos += 1
        right_ref = None
        bottom_ref = None
        if has_right:
            right_ref = refs[pos]; pos += 1
        if has_bottom:
            bottom_ref = refs[pos]; pos += 1
        o_ref = refs[pos]
        slab_ref = refs[pos + 1]          # VMEM (c, ps, wp*ps): padded patch-row

        ii = pl.program_id(1)

        # Interior columns of this patch-row.  For the last patch-row the rows
        # past the image bottom are unspecified here and overwritten below.
        slab_ref[:, :, :w] = x_ref[0]
        if has_right:
            # Right reflection: pre-flipped column strip, one dense store.
            slab_ref[:, :, w:] = right_ref[0]
        if has_bottom:
            @pl.when(ii == hp - 1)
            def _():
                # Bottom reflection (incl. bottom-right corner): pre-flipped,
                # already right-padded row strip, one dense store.
                slab_ref[:, ps - h_padding:, :] = bottom_ref[0]

        emit_patches(lambda col0: slab_ref[:, :, pl.ds(col0, ps)], o_ref)

    return kernel


# ---------------------------------------------------------------------------
# Wrapper (PatchEmbed_tensor.forward equivalent).
# ---------------------------------------------------------------------------
def patch_embed_tensor(x, patch_size=16):
    b, c, h, w = (int(d) for d in x.shape)
    ps = int(patch_size)
    hp, wp, h_padding, w_padding = _patch_geometry(h, w, ps)
    # Same restriction as nn.ReflectionPad2d: padding must be < dim size.
    if (h_padding > 0 and h_padding >= h) or (w_padding > 0 and w_padding >= w):
        raise ValueError("reflection padding must be smaller than the "
                         "corresponding input dimension")
    H_pad, W_pad = hp * ps, wp * ps
    n_patches = hp * wp
    meta = [hp, wp, h_padding, w_padding]
    itemsize = jnp.dtype(x.dtype).itemsize

    inputs = [x]
    in_specs = [pl.BlockSpec((1, c, ps, w), lambda bi, ii: (bi, 0, ii, 0))]

    if w_padding > 0:
        # Reflected right columns of every raw row, pre-flipped so the kernel
        # writes them with a single contiguous copy.  Tiny (w_padding < ps cols).
        right = jnp.flip(x[:, :, :, w - 1 - w_padding:w - 1], axis=3)
        inputs.append(right)
        in_specs.append(
            pl.BlockSpec((1, c, ps, w_padding), lambda bi, ii: (bi, 0, ii, 0)))

    if h_padding > 0:
        # Reflected bottom rows, pre-flipped and right-padded so the
        # bottom-right corner is reflected in both directions.  Tiny strip.
        brows = jnp.flip(x[:, :, h - 1 - h_padding:h - 1, :], axis=2)
        if w_padding > 0:
            bright = jnp.flip(brows[:, :, :, w - 1 - w_padding:w - 1], axis=3)
            bottom = jnp.concatenate([brows, bright], axis=3)
        else:
            bottom = brows
        inputs.append(bottom)
        in_specs.append(
            pl.BlockSpec((1, c, h_padding, W_pad), lambda bi, ii: (bi, 0, 0, 0)))

    scratch_shapes = []
    if h_padding > 0 or w_padding > 0:
        scratch_shapes.append(pltpu.VMEM((c, ps, W_pad), x.dtype))

    kernel = _make_patch_row_kernel(c, w, ps, hp, wp, h_padding, w_padding)

    cost = pl.CostEstimate(
        flops=0, transcendentals=0,
        bytes_accessed=int(itemsize * b * c * (h * w + H_pad * W_pad)))

    patch_matrix = pl.pallas_call(
        kernel,
        out_shape=jax.ShapeDtypeStruct((b, c, n_patches, ps, ps), x.dtype),
        grid=(b, hp),
        in_specs=in_specs,
        out_specs=pl.BlockSpec((1, c, wp, ps, ps),
                               lambda bi, ii: (bi, 0, ii, 0, 0)),
        scratch_shapes=scratch_shapes,
        compiler_params=pltpu.CompilerParams(
            dimension_semantics=("parallel", "parallel"),
            vmem_limit_bytes=_vmem_limit_bytes()),
        cost_estimate=cost,
    )(*inputs)
    return patch_matrix, meta


# ---------------------------------------------------------------------------
# Pure-JAX reference mirroring the PyTorch loop, for correctness checking.
# ---------------------------------------------------------------------------
def _reference_patch_embed(x, patch_size):
    b, c, h, w = x.shape
    hp, wp, hpad, wpad = _patch_geometry(h, w, patch_size)
    xp = x
    if hpad or wpad:
        xp = jnp.pad(x, ((0, 0), (0, 0), (0, hpad), (0, wpad)), mode="reflect")
    patches = []
    for i in range(hp):
        for j in range(wp):
            patches.append(xp[:, :,
                              i * patch_size:(i + 1) * patch_size,
                              j * patch_size:(j + 1) * patch_size])
    return jnp.stack(patches, axis=2), [hp, wp, hpad, wpad]


if __name__ == "__main__":
    key = jax.random.PRNGKey(0)
    ps = 8
    cases = [
        (2, 4, 16, 16),   # no padding needed
        (2, 3, 20, 20),   # bottom + right reflection padding (and corner)
        (2, 3, 21, 16),   # bottom-only padding
        (2, 3, 16, 21),   # right-only padding
    ]
    for idx, shape in enumerate(cases):
        x = jax.random.normal(jax.random.fold_in(key, idx), shape,
                              dtype=jnp.float32)
        out, meta = patch_embed_tensor(x, patch_size=ps)
        out = jax.block_until_ready(out)
        ref, ref_meta = _reference_patch_embed(x, ps)
        assert out.shape == ref.shape, (shape, out.shape, ref.shape)
        assert meta == ref_meta, (shape, meta, ref_meta)
        np.testing.assert_array_equal(np.asarray(out), np.asarray(ref))

    print("KERNEL_OK")
</pallas_src>

<mosaic_0001>
module attributes {stable_mosaic.version = 11 : i64} {
  func.func @kernel(%arg0: i32, %arg1: i32, %arg2: memref<1x4x8x16xf32, #tpu.memory_space<vmem>>, %arg3: memref<1x4x2x8x8xf32, #tpu.memory_space<vmem>>) attributes {dimension_semantics = [#tpu.dimension_semantics<parallel>, #tpu.dimension_semantics<parallel>], iteration_bounds = array<i64: 2, 2>, scalar_prefetch = 0 : i64, scratch_operands = 0 : i64, tpu.core_type = #tpu.core_type<tc>, window_params = [{transform_indices = @transform_0, window_bounds = array<i64: 1, 4, 8, 16>}, {transform_indices = @transform_1, window_bounds = array<i64: 1, 4, 2, 8, 8>}]} {
    %c0 = arith.constant 0 : index
    %c0_0 = arith.constant 0 : index
    %c0_1 = arith.constant 0 : index
    %c0_2 = arith.constant 0 : index
    %0 = vector.load %arg2[%c0, %c0_0, %c0_1, %c0_2] : memref<1x4x8x16xf32, #tpu.memory_space<vmem>>, vector<1x4x8x8xf32>
    %1 = vector.shape_cast %0 : vector<1x4x8x8xf32> to vector<4x8x8xf32>
    %c0_3 = arith.constant 0 : index
    %c0_4 = arith.constant 0 : index
    %c0_5 = arith.constant 0 : index
    %c0_6 = arith.constant 0 : index
    %c0_7 = arith.constant 0 : index
    %2 = vector.load %arg3[%c0_3, %c0_4, %c0_5, %c0_6, %c0_7] : memref<1x4x2x8x8xf32, #tpu.memory_space<vmem>>, vector<1x4x1x8x8xf32>
    %3 = vector.shape_cast %2 : vector<1x4x1x8x8xf32> to vector<4x8x8xf32>
    %4 = vector.shape_cast %1 : vector<4x8x8xf32> to vector<1x4x1x8x8xf32>
    tpu.vector_store %arg3[%c0_3, %c0_4, %c0_5, %c0_6, %c0_7], %4 {strides = array<i32>} : memref<1x4x2x8x8xf32, #tpu.memory_space<vmem>>, vector<1x4x1x8x8xf32>,
    %c0_8 = arith.constant 0 : index
    %c0_9 = arith.constant 0 : index
    %c0_10 = arith.constant 0 : index
    %c8 = arith.constant 8 : index
    %5 = vector.load %arg2[%c0_8, %c0_9, %c0_10, %c8] : memref<1x4x8x16xf32, #tpu.memory_space<vmem>>, vector<1x4x8x8xf32>
    %6 = vector.shape_cast %5 : vector<1x4x8x8xf32> to vector<4x8x8xf32>
    %c0_11 = arith.constant 0 : index
    %c0_12 = arith.constant 0 : index
    %c1 = arith.constant 1 : index
    %c0_13 = arith.constant 0 : index
    %c0_14 = arith.constant 0 : index
    %7 = vector.load %arg3[%c0_11, %c0_12, %c1, %c0_13, %c0_14] : memref<1x4x2x8x8xf32, #tpu.memory_space<vmem>>, vector<1x4x1x8x8xf32>
    %8 = vector.shape_cast %7 : vector<1x4x1x8x8xf32> to vector<4x8x8xf32>
    %9 = vector.shape_cast %6 : vector<4x8x8xf32> to vector<1x4x1x8x8xf32>
    tpu.vector_store %arg3[%c0_11, %c0_12, %c1, %c0_13, %c0_14], %9 {strides = array<i32>} : memref<1x4x2x8x8xf32, #tpu.memory_space<vmem>>, vector<1x4x1x8x8xf32>,
    return
  }
  func.func @transform_0(%arg0: i32, %arg1: i32) -> (i32, i32, i32, i32) {
    %c0_i32 = arith.constant 0 : i32
    %c0_i32_0 = arith.constant 0 : i32
    %c0_i32_1 = arith.constant 0 : i32
    return %arg0, %c0_i32, %arg1, %c0_i32_0 : i32, i32, i32, i32
  }
  func.func @transform_1(%arg0: i32, %arg1: i32) -> (i32, i32, i32, i32, i32) {
    %c0_i32 = arith.constant 0 : i32
    %c0_i32_0 = arith.constant 0 : i32
    %c0_i32_1 = arith.constant 0 : i32
    %c0_i32_2 = arith.constant 0 : i32
    return %arg0, %c0_i32, %arg1, %c0_i32_0, %c0_i32_1 : i32, i32, i32, i32, i32
  }
}

</mosaic_0001>

<llo_original>
// kernel: tpu_custom_call.1
$region0: #{tpu_custom_call.1}
  #allocation0 [shape = 'u32[]', space=smem, size = 0x4, offset = 0x4, fixed_abs, tag = 'smem constant byte address 0x4 - core index']
  #allocation1 [shape = 'u32[144,128]{1,0:T(1,128)}', space=vmem, size = 0x12000, scoped, tag = 'internal scratch']
  #allocation6 [shape = 's32[]', space=sflag, size = 0x4, offset = 0, fixed_abs, tag = 'sflag constant byte address 0x0 - dummy sync flag']
  %s0 = inlined_call_operand.hbm [shape: f32[2,4,16,16], index: 0, kind: input, shape index: {}]
  %s1 = inlined_call_operand.hbm [shape: f32[2,4,4,8,8], index: 1, kind: output, shape index: {}]
  %s2 = sld [smem:[#allocation0]]
  $region41: #{tpu_custom_call.1} parent=0
    _
  %s4 = ssub.s32 1, %s2
  %s5 = scalar_select 0, %s4, %s2
  $region1: #{tpu_custom_call.1} parent=0
    #allocation2 [shape = 'u8[32768]{0}', space=vmem, size = 0x8000, scoped, tag = 'input window, operand 0']
    #allocation3 [shape = 's32[2]{0}', space=sflag, size = 0x8, scoped, tag = 'scoped memory for tpu_custom_call.1']
    #allocation4 [shape = 's32[2]{0}', space=sflag, size = 0x8, scoped, tag = 'scoped memory for tpu_custom_call.1']
    #allocation5 [shape = 'u8[65536]{0}', space=vmem, size = 0x10000, scoped, tag = 'output window, operand 0']
    %6 = vsyncpa [#allocation3], 0
    %s7 = scalar_lea.sflag [#allocation3], 1
    %8 = vsyncpa %s7, 0
    %9 = vsyncpa [#allocation4], 0
    %s10 = scalar_lea.sflag [#allocation4], 1
    %11 = vsyncpa %s10, 0
    loop: start=0, step=1, limit=6
    $region2: #{tpu_custom_call.1} parent=1 // loop_pre_header
      _
    $region3: #{tpu_custom_call.1} parent=1 // loop_header
      %s13 = sphi 0, %s17
      %p14 = scmp.ge.s32.totalorder %s13, 6
      %s20 = sphi 0, %s32
      %s21 = sphi 0, %s28
      %s22 = sphi 0, %s20
      %s23 = sphi 0, %s21
      %s24 = sphi 0, %s22
      %s25 = sphi 0, %s23
      %s37 = sphi 0, %s39
      %s40 = sphi 0, %s37
      %s41 = sphi 0, %s40
      %s57 = sphi 0, %s41
      %s65 = sphi 0, %s67
      %s68 = sphi 0, %s65
      %s69 = sphi 0, %s68
      %s85 = sphi 0, %s69
    $region4: #{tpu_custom_call.1} parent=1 // loop_header_branch
      %16 = sbr.rel (%p14) target = $region8
    $region5: #{tpu_custom_call.1} parent=1 // loop_body
      %s18 = ssub.s32 %s13, 1
      %s19 = ssub.s32 %s13, 2
      %s26 = sadd.s32 1, %s21
      %p27 = scmp.ge.s32.totalorder %s26, 2
      %s28 = scalar_select %p27, 0, %s26
      %s29 = sadd.s32 1, %s20
      %s30 = scalar_select %p27, %s29, %s20
      %p31 = scmp.ge.s32.totalorder %s30, 2
      %s32 = scalar_select %p31, 0, %s30
      %s33 = ssub.s32 %s20, %s32
      %s34 = ssub.s32 %s21, %s28
      %s35 = sor.u32 %s33, %s34
      %p36 = scmp.eq.s32.totalorder %s35, 0
      %s38 = sadd.s32 %s37, 1
      %s39 = scalar_select %p36, %s37, %s38
      %p42 = pneg %p36
      %p43 = scmp.eq.s32.totalorder %s13, 3
      %p44 = por %p42, %p43
      %p45 = scmp.ne.s32.totalorder %s37, %s40
      %p46 = scmp.eq.s32.totalorder %s13, 0
      %p47 = por %p45, %p46
      %p48 = scmp.ne.s32.totalorder %s37, %s40
      %p49 = scmp.eq.s32.totalorder %s18, 3
      %p50 = por %p48, %p49
      %p51 = scmp.ne.s32.totalorder %s40, %s41
      %p52 = scmp.eq.s32.totalorder %s18, 0
      %p53 = por %p51, %p52
      %p54 = scmp.ne.s32.totalorder %s40, %s41
      %p55 = scmp.eq.s32.totalorder %s19, 3
      %p56 = por %p54, %p55
      %p58 = scmp.ne.s32.totalorder %s41, %s57
      %p59 = scmp.eq.s32.totalorder %s19, 0
      %p60 = por %p58, %p59
      %s61 = ssub.s32 %s20, %s32
      %s62 = ssub.s32 %s21, %s28
      %s63 = sor.u32 %s61, %s62
      %p64 = scmp.eq.s32.totalorder %s63, 0
      %s66 = sadd.s32 %s65, 1
      %s67 = scalar_select %p64, %s65, %s66
      %p70 = pneg %p64
      %p71 = scmp.eq.s32.totalorder %s13, 3
      %p72 = por %p70, %p71
      %p73 = scmp.ne.s32.totalorder %s65, %s68
      %p74 = scmp.eq.s32.totalorder %s13, 0
      %p75 = por %p73, %p74
      %p76 = scmp.ne.s32.totalorder %s65, %s68
      %p77 = scmp.eq.s32.totalorder %s18, 3
      %p78 = por %p76, %p77
      %p79 = scmp.ne.s32.totalorder %s68, %s69
      %p80 = scmp.eq.s32.totalorder %s18, 0
      %p81 = por %p79, %p80
      %p82 = scmp.ne.s32.totalorder %s68, %s69
      %p83 = scmp.eq.s32.totalorder %s19, 3
      %p84 = por %p82, %p83
      %p86 = scmp.ne.s32.totalorder %s69, %s85
      %p87 = scmp.eq.s32.totalorder %s19, 0
      %p88 = por %p86, %p87
      %p89 = scmp.le.s32.totalorder 1, %s13
      %p90 = scmp.lt.s32.totalorder %s13, 5
      %p91 = pnand %p89, %p90
      %p92 = pneg %p91
      // Predicated region
      $region9: #{tpu_custom_call.1} parent=5 // pred_check
        _
      $region10: #{tpu_custom_call.1} parent=5 // pred_check_branch
        %94 = sbr.rel (%p91) target = $region12
      $region11: #{tpu_custom_call.1} parent=5 // pred_region
        %s95 = ssub.s32 %s13, 1
      $region12: #{tpu_custom_call.1} parent=5 // pred_fallthru
        _
      %p96 = scmp.lt.s32.totalorder %s13, 4
      // Predicated region
      $region13: #{tpu_custom_call.1} parent=5 // pred_check
        %p97 = pneg %p96
      $region14: #{tpu_custom_call.1} parent=5 // pred_check_branch
        %99 = sbr.rel (%p97) target = $region16
      $region15: #{tpu_custom_call.1} parent=5 // pred_region
        // Predicated region
        $region17: #{tpu_custom_call.1} parent=15 // pred_check
          %p100 = pneg %p47
        $region18: #{tpu_custom_call.1} parent=15 // pred_check_branch
          %102 = sbr.rel (%p100) target = $region20
        $region19: #{tpu_custom_call.1} parent=15 // pred_region
          %s103 = sand.u32 %s37, 1
          %s104 = scalar_lea.sflag [#allocation3], %s103
          %s105 = sand.u32 %s37, 1
          %s106 = smul.addr %s105, 32
          %s107 = scalar_lea.vmem [#allocation2], %s106
          %s109 = ssub.s32 512, 512
          %110 = vsyncadd %s104, %s109
          %s111 = smul.addr %s20, 8
          %s112 = sadd.s32 %s21, %s111
          %s113 = smul.addr %s112, 128
          %s114 = scalar_lea.hbm %s0, %s113
          %s115 = sshll.u32 %s107, 4
          %s116 = int_to_ptr.vmem [resolvable:$true] %s115
          %121 = dma.hbm_to_vmem [thread:$0]  %s114, 512, %s116, %s104, 256, 128, 8
        $region20: #{tpu_custom_call.1} parent=15 // pred_fallthru
          _
      $region16: #{tpu_custom_call.1} parent=5 // pred_fallthru
        _
      %p122 = scmp.le.s32.totalorder 1, %s13
      %p123 = scmp.lt.s32.totalorder %s13, 5
      %p124 = pnand %p122, %p123
      %p125 = pneg %p124
      // Predicated region
      $region21: #{tpu_custom_call.1} parent=5 // pred_check
        _
      $region22: #{tpu_custom_call.1} parent=5 // pred_check_branch
        %127 = sbr.rel (%p124) target = $region24
      $region23: #{tpu_custom_call.1} parent=5 // pred_region
        %s128 = ssub.s32 %s13, 1
        %s129 = sand.u32 %s40, 1
        %s130 = scalar_lea.sflag [#allocation3], %s129
        %s131 = sand.u32 %s40, 1
        %s132 = smul.addr %s131, 32
        %s133 = scalar_lea.vmem [#allocation2], %s132
        // Predicated region
        $region25: #{tpu_custom_call.1} parent=23 // pred_check
          %p134 = pneg %p53
        $region26: #{tpu_custom_call.1} parent=23 // pred_check_branch
          %136 = sbr.rel (%p134) target = $region28
        $region27: #{tpu_custom_call.1} parent=23 // pred_region
          %137 = dma.done %s130, 512
        $region28: #{tpu_custom_call.1} parent=23 // pred_fallthru
          _
        %s138 = sand.u32 %s40, 1
        %s139 = scalar_lea.sflag [#allocation3], %s138
        %s140 = sand.u32 %s40, 1
        %s141 = smul.addr %s140, 32
        %s142 = scalar_lea.vmem [#allocation2], %s141
        %p143 = pneg %p53
        %p144 = pneg %p50
        %p145 = pneg %p81
        %p146 = pneg %p78
        %s147 = sand.u32 %s68, 1
        %s148 = scalar_lea.sflag [#allocation4], %s147
        %s149 = sand.u32 %s68, 1
        %s150 = smul.addr %s149, 64
        %s151 = scalar_lea.vmem [#allocation5], %s150
        %s152 = smul.u32 2, %s23
        %v153 = vld [vmem:[%s133] sm:$0xff]
        %v154 = vld [vmem:[%s133 + $0x8] sm:$0xff]
        %v155 = vld [vmem:[%s133 + $0x10] sm:$0xff]
        %v156 = vld [vmem:[%s133 + $0x18] sm:$0xff]
        %vm157 = vcmask 64512
        %158 = vst.msk [vmem:[%s151] sm:$0xff] %vm157, %v153
        %159 = vst.msk [vmem:[%s151 + $0x10] sm:$0xff] %vm157, %v154
        %160 = vst.msk [vmem:[%s151 + $0x20] sm:$0xff] %vm157, %v155
        %161 = vst.msk [vmem:[%s151 + $0x30] sm:$0xff] %vm157, %v156
        %v162 = vld [vmem:[%s133] sm:$0xff]
        %v163 = vld [vmem:[%s133 + $0x8] sm:$0xff]
        %v164 = vld [vmem:[%s133 + $0x10] sm:$0xff]
        %v165 = vld [vmem:[%s133 + $0x18] sm:$0xff]
        %170 = vrot.lane.b32.xlu0 %v162, 120
        %v171 = vpop.permute.xlu0 %170
        %172 = vrot.lane.b32.xlu0 %v163, 120
        %v173 = vpop.permute.xlu0 %172
        %174 = vrot.lane.b32.xlu0 %v164, 120
        %v175 = vpop.permute.xlu0 %174
        %176 = vrot.lane.b32.xlu0 %v165, 120
        %v177 = vpop.permute.xlu0 %176
        %s182 = scalar_lea.vmem %s151, 8 [#allocation5]
        %183 = vst.msk [vmem:[%s182] sm:$0xff] %vm157, %v171
        %184 = vst.msk [vmem:[%s182 + $0x10] sm:$0xff] %vm157, %v173
        %185 = vst.msk [vmem:[%s182 + $0x20] sm:$0xff] %vm157, %v175
        %186 = vst.msk [vmem:[%s182 + $0x30] sm:$0xff] %vm157, %v177
        %s187 = sand.u32 %s68, 1
        %s188 = scalar_lea.sflag [#allocation4], %s187
        %s189 = sand.u32 %s68, 1
        %s190 = smul.addr %s189, 64
        %s191 = scalar_lea.vmem [#allocation5], %s190
        // Predicated region
        $region29: #{tpu_custom_call.1} parent=23 // pred_check
          %p192 = pneg %p78
        $region30: #{tpu_custom_call.1} parent=23 // pred_check_branch
          %194 = sbr.rel (%p192) target = $region32
        $region31: #{tpu_custom_call.1} parent=23 // pred_region
          #allocation7 [shape = 'u32[6]{0}', space=smem, size = 0x18, scoped, tag = 'DMA stride descriptor']
          %s195 = smul.u32 2, %s23
          %s197 = ssub.s32 1024, 1024
          %198 = vsyncadd %s188, %s197
          %s199 = smul.addr %s22, 16
          %s200 = sadd.s32 %s195, %s199
          %s201 = smul.addr %s200, 128
          %s202 = scalar_lea.hbm %s1, %s201
          %s204 = sshll.u32 1, 14
          %s205 = sxor.u32 4294967295, %s204
          %s208 = sshll.u32 7, 18
          %s209 = sxor.u32 4294967295, %s208
          %s210 = sand.u32 0, %s209
          %s212 = sor.u32 %s210, 0
          %s213 = sshll.u32 %s191, 4
          %s214 = int_to_ptr.vmem [resolvable:$true] %s213
          %220 = sst [smem:[#allocation7]] 256
          %s221 = scalar_lea.smem [#allocation7], 1
          %222 = sst [smem:[%s221]] 512
          %s223 = scalar_lea.smem [#allocation7], 2
          %224 = sst [smem:[%s223]] 2
          %s225 = scalar_lea.smem [#allocation7], 3
          %226 = sst [smem:[%s225]] 128
          %s227 = scalar_lea.smem [#allocation7], 4
          %228 = sst [smem:[%s227]] 128
          %s229 = scalar_lea.smem [#allocation7], 5
          %230 = sst [smem:[%s229]] 8
          %232 = dma.general %s214, 1024, %s202, %s188, 131072, [#allocation7], %s212, 0
        $region32: #{tpu_custom_call.1} parent=23 // pred_fallthru
          _
      $region24: #{tpu_custom_call.1} parent=5 // pred_fallthru
        _
      %p233 = scmp.le.s32.totalorder 2, %s13
      // Predicated region
      $region33: #{tpu_custom_call.1} parent=5 // pred_check
        %p234 = pneg %p233
      $region34: #{tpu_custom_call.1} parent=5 // pred_check_branch
        %236 = sbr.rel (%p234) target = $region36
      $region35: #{tpu_custom_call.1} parent=5 // pred_region
        %s237 = ssub.s32 %s13, 2
        // Predicated region
        $region37: #{tpu_custom_call.1} parent=35 // pred_check
          %p238 = pneg %p84
        $region38: #{tpu_custom_call.1} parent=35 // pred_check_branch
          %240 = sbr.rel (%p238) target = $region40
        $region39: #{tpu_custom_call.1} parent=35 // pred_region
          %s241 = sand.u32 %s69, 1
          %s242 = scalar_lea.sflag [#allocation4], %s241
          %s243 = sand.u32 %s69, 1
          %s244 = smul.addr %s243, 64
          %s245 = scalar_lea.vmem [#allocation5], %s244
          %246 = dma.done %s242, 1024
        $region40: #{tpu_custom_call.1} parent=35 // pred_fallthru
          _
      $region36: #{tpu_custom_call.1} parent=5 // pred_fallthru
        _
    $region6: #{tpu_custom_call.1} parent=1 // loop_footer
      %s17 = sadd.s32 1, %s13
    $region7: #{tpu_custom_call.1} parent=1 // loop_footer_branch
      %12 = sbr.rel target = $region3
    $region8: #{tpu_custom_call.1} parent=1 // loop_exit
      _
    %247 = vsyncpa [#allocation3], 1
    %s248 = scalar_lea.sflag [#allocation3], 1
    %249 = vsyncpa %s248, 1
    %250 = vsyncpa [#allocation4], 1
    %s251 = scalar_lea.sflag [#allocation4], 1
    %252 = vsyncpa %s251, 1

</llo_original>
